<compile_context>
chip_gen: v7x
topology: tpu7x:2x2x1
jax: 0.10.0
libtpu: 0.0.40
codegen_flags: <defaults>
</compile_context>

<pallas_src>
import functools

import jax
import jax.numpy as jnp
from jax.experimental import pallas as pl
from jax.experimental.pallas import tpu as pltpu


def _round_up(v, m):
    return ((v + m - 1) // m) * m


def residual_ffn_kernel(x_ref, w1_ref, b1_ref, w2_ref, b2_ref, o_ref, *, h_chunk):
    # x_ref : (TILE_M, D) input dtype (f32 or bf16)
    # w1_ref: (D, H)      bf16  (VMEM-resident, single-buffered)
    # b1_ref: (1, H)      f32
    # w2_ref: (H, D)      bf16  (VMEM-resident, single-buffered)
    # b2_ref: (1, D)      f32
    # o_ref : (TILE_M, D) x.dtype
    x = x_ref[...].astype(jnp.float32)       # residual kept exact in f32
    xb = x.astype(jnp.bfloat16)              # one cheap VPU cast for the MXU

    tm = x.shape[0]
    H = w1_ref.shape[1]
    D = o_ref.shape[1]

    # Chunk the hidden dimension: the f32 intermediate is (tm, h_chunk)
    # instead of (tm, H); the second matmul accumulates in f32. Static
    # Python loop -> static, tile-aligned slices of the resident weights.
    acc = jnp.zeros((tm, D), jnp.float32)
    bounds = list(range(0, H, h_chunk)) + [H]
    for lo, hi in zip(bounds[:-1], bounds[1:]):
        h = jnp.dot(xb, w1_ref[:, lo:hi], preferred_element_type=jnp.float32)
        h = h + b1_ref[:, lo:hi]             # f32 epilogue (v5e-safe)
        # tanh-approx GELU; tanh/exp run on the EUP slot (nearly free).
        # TODO(synk): switch to exact erf GELU if bit-matching torch's
        # default nn.GELU() is required.
        h = jax.nn.gelu(h, approximate=True)
        acc = acc + jnp.dot(h.astype(jnp.bfloat16), w2_ref[lo:hi, :],
                            preferred_element_type=jnp.float32)

    # Residual in f32, single downcast at the store.
    o_ref[...] = (acc + b2_ref[...] + x).astype(o_ref.dtype)


def residual_ffn(x, w1, b1, w2, b2, *, tile_m=512, h_chunk=1024):
    """Residual(FeedForward)(x) = GELU(x @ w1 + b1) @ w2 + b2 + x.

    x: (B, N, D). Tokens flattened to M = B*N rows, tiled over an M grid;
    weights/biases stay VMEM-resident (single-buffered) across the grid.
    D and H should be multiples of 128 (ideally 256) for lane-dense stores
    and full-width MXU passes.
    """
    B, N, D = x.shape
    H = w1.shape[1]
    M = B * N

    x2 = x.reshape(M, D)

    # MXU-native weight dtype; f32 biases for the f32 epilogue.
    w1b = w1.astype(jnp.bfloat16)
    w2b = w2.astype(jnp.bfloat16)
    b1_2 = b1.reshape(1, H).astype(jnp.float32)
    b2_2 = b2.reshape(1, D).astype(jnp.float32)

    # --- token-tile size ----------------------------------------------------
    # No padding: grid = cdiv(M, tm); the last block may be ragged (rows are
    # independent, OOB reads are row-local, OOB writes are dropped).
    # Cap tm so grid_m >= 2 when possible (v7x: both TensorCores get work);
    # large tiles are rounded to a multiple of 256 (v6e/v7x MXU height).
    tm = min(tile_m, _round_up(max(pl.cdiv(M, 2), 8), 8))
    if tm >= 256:
        tm = (tm // 256) * 256
    tm = max(8, (tm // 8) * 8)
    grid_m = pl.cdiv(M, tm)

    # Hidden-dim chunk: multiple of 128 lanes when H allows it.
    hc = min(h_chunk, H)
    if H >= 128:
        hc = max(128, (hc // 128) * 128)

    # --- per-chip VMEM budget -----------------------------------------------
    try:
        physical_vmem = int(pltpu.get_tpu_info().vmem_capacity_bytes)
    except Exception:
        physical_vmem = 64 * 1024 * 1024       # conservative fallback (v7x)
    in_bytes = x2.dtype.itemsize
    need = (2 * D * H * 2 + (H + D) * 4        # weights/biases, single-buffered
            + 2 * tm * D * in_bytes            # x tile, double-buffered
            + 2 * tm * D * in_bytes            # out tile, double-buffered
            + tm * hc * 4 + tm * D * 4)        # hidden chunk + f32 accumulator
    vmem_limit = int(min(int(physical_vmem * 0.85),
                         max(2 * need, 32 * 1024 * 1024)))

    cost = pl.CostEstimate(
        flops=4 * M * D * H,                               # two matmuls
        transcendentals=M * H,                             # GELU tanh
        bytes_accessed=int(2 * M * D * in_bytes            # x in + out
                           + 2 * D * H * 2                 # bf16 weights
                           + (H + D) * 4),                 # biases
    )

    kernel = functools.partial(residual_ffn_kernel, h_chunk=hc)

    out = pl.pallas_call(
        kernel,
        out_shape=jax.ShapeDtypeStruct((M, D), x.dtype),
        grid_spec=pltpu.PrefetchScalarGridSpec(
            num_scalar_prefetch=0,
            grid=(grid_m,),
            in_specs=[
                pl.BlockSpec((tm, D), lambda i: (i, 0)),          # x (pipelined)
                pl.BlockSpec((D, H), lambda i: (0, 0),
                             pipeline_mode=pl.Buffered(1)),       # w1 resident
                pl.BlockSpec((1, H), lambda i: (0, 0),
                             pipeline_mode=pl.Buffered(1)),       # b1 resident
                pl.BlockSpec((H, D), lambda i: (0, 0),
                             pipeline_mode=pl.Buffered(1)),       # w2 resident
                pl.BlockSpec((1, D), lambda i: (0, 0),
                             pipeline_mode=pl.Buffered(1)),       # b2 resident
            ],
            out_specs=pl.BlockSpec((tm, D), lambda i: (i, 0)),
        ),
        compiler_params=pltpu.CompilerParams(
            dimension_semantics=("parallel",),   # shard M tiles across TCs
            vmem_limit_bytes=vmem_limit,
        ),
        cost_estimate=cost,
    )(x2, w1b, b1_2, w2b, b2_2)

    return out.reshape(B, N, D)


if __name__ == "__main__":
    # Small, lane-dense shapes: D, H multiples of 128. M=16 -> tm=8, grid=2
    # (both TCs get work on v7x); h_chunk=256 -> two hidden chunks so the
    # in-kernel H loop is exercised.
    B, N, D, H = 2, 8, 128, 512
    key = jax.random.PRNGKey(0)
    kx, k1, k2, k3, k4 = jax.random.split(key, 5)

    x = jax.random.normal(kx, (B, N, D), dtype=jnp.float32)
    w1 = jax.random.normal(k1, (D, H), dtype=jnp.float32) * 0.05
    b1 = jax.random.normal(k2, (H,), dtype=jnp.float32) * 0.01
    w2 = jax.random.normal(k3, (H, D), dtype=jnp.float32) * 0.05
    b2 = jax.random.normal(k4, (D,), dtype=jnp.float32) * 0.01

    out = residual_ffn(x, w1, b1, w2, b2, h_chunk=256)
    jax.block_until_ready(out)

    # Reference (plain JAX) using the same bf16-operand / f32-accumulate recipe.
    xf = x.reshape(-1, D)
    h_ref = jnp.dot(xf.astype(jnp.bfloat16), w1.astype(jnp.bfloat16),
                    preferred_element_type=jnp.float32) + b1
    h_ref = jax.nn.gelu(h_ref, approximate=True)
    y_ref = jnp.dot(h_ref.astype(jnp.bfloat16), w2.astype(jnp.bfloat16),
                    preferred_element_type=jnp.float32) + b2
    ref = (y_ref + xf).reshape(B, N, D)

    assert jnp.allclose(out, ref, atol=2e-2, rtol=2e-2), "mismatch vs reference"
    print("KERNEL_OK")
</pallas_src>

<mosaic_0001>
module attributes {stable_mosaic.version = 11 : i64} {
  func.func @residual_ffn_kernel(%arg0: i32, %arg1: memref<8x128xf32, #tpu.memory_space<vmem>>, %arg2: memref<128x512xbf16, #tpu.memory_space<vmem>>, %arg3: memref<1x512xf32, #tpu.memory_space<vmem>>, %arg4: memref<512x128xbf16, #tpu.memory_space<vmem>>, %arg5: memref<1x128xf32, #tpu.memory_space<vmem>>, %arg6: memref<8x128xf32, #tpu.memory_space<vmem>>) attributes {dimension_semantics = [#tpu.dimension_semantics<parallel>], iteration_bounds = array<i64: 2>, scalar_prefetch = 0 : i64, scratch_operands = 0 : i64, tpu.core_type = #tpu.core_type<tc>, window_params = [{transform_indices = @transform_0, window_bounds = array<i64: 8, 128>}, {pipeline_mode = #tpu.pipeline_mode<synchronous>, transform_indices = @transform_1, window_bounds = array<i64: 128, 512>}, {pipeline_mode = #tpu.pipeline_mode<synchronous>, transform_indices = @transform_2, window_bounds = array<i64: 1, 512>}, {pipeline_mode = #tpu.pipeline_mode<synchronous>, transform_indices = @transform_3, window_bounds = array<i64: 512, 128>}, {pipeline_mode = #tpu.pipeline_mode<synchronous>, transform_indices = @transform_4, window_bounds = array<i64: 1, 128>}, {transform_indices = @transform_5, window_bounds = array<i64: 8, 128>}]} {
    %c0 = arith.constant 0 : index
    %c0_0 = arith.constant 0 : index
    %0 = vector.load %arg1[%c0, %c0_0] : memref<8x128xf32, #tpu.memory_space<vmem>>, vector<8x128xf32>
    %1 = arith.truncf %0 : vector<8x128xf32> to vector<8x128xbf16>
    %cst = arith.constant 0.000000e+00 : f32
    %2 = vector.broadcast %cst : f32 to vector<8x128xf32>
    %c0_1 = arith.constant 0 : index
    %c0_2 = arith.constant 0 : index
    %3 = vector.load %arg2[%c0_1, %c0_2] : memref<128x512xbf16, #tpu.memory_space<vmem>>, vector<128x256xbf16>
    %cst_3 = arith.constant dense<0.000000e+00> : vector<8x256xf32>
    %4 = tpu.matmul %1, %3, %cst_3 {dimension_numbers = #tpu.dot_dimension_numbers<[1], [0], [0], [1], [0, 0, 1, 1], [], []>} : vector<8x128xbf16>, vector<128x256xbf16>, vector<8x256xf32> -> vector<8x256xf32>
    %c0_4 = arith.constant 0 : index
    %c0_5 = arith.constant 0 : index
    %5 = vector.load %arg3[%c0_4, %c0_5] : memref<1x512xf32, #tpu.memory_space<vmem>>, vector<1x256xf32>
    %6 = vector.broadcast %5 : vector<1x256xf32> to vector<8x256xf32>
    %7 = arith.addf %4, %6 : vector<8x256xf32>
    %8 = arith.mulf %7, %7 : vector<8x256xf32>
    %9 = arith.mulf %7, %8 : vector<8x256xf32>
    %cst_6 = arith.constant 4.471500e-02 : f32
    %10 = vector.broadcast %cst_6 : f32 to vector<8x256xf32>
    %11 = arith.mulf %10, %9 : vector<8x256xf32>
    %12 = arith.addf %7, %11 : vector<8x256xf32>
    %cst_7 = arith.constant 0.797884583 : f32
    %13 = vector.broadcast %cst_7 : f32 to vector<8x256xf32>
    %14 = arith.mulf %13, %12 : vector<8x256xf32>
    %15 = math.tanh %14 : vector<8x256xf32>
    %cst_8 = arith.constant 1.000000e+00 : f32
    %16 = vector.broadcast %cst_8 : f32 to vector<8x256xf32>
    %17 = arith.addf %16, %15 : vector<8x256xf32>
    %cst_9 = arith.constant 5.000000e-01 : f32
    %18 = vector.broadcast %cst_9 : f32 to vector<8x256xf32>
    %19 = arith.mulf %18, %17 : vector<8x256xf32>
    %20 = arith.mulf %7, %19 : vector<8x256xf32>
    %21 = arith.truncf %20 : vector<8x256xf32> to vector<8x256xbf16>
    %c0_10 = arith.constant 0 : index
    %c0_11 = arith.constant 0 : index
    %22 = vector.load %arg4[%c0_10, %c0_11] : memref<512x128xbf16, #tpu.memory_space<vmem>>, vector<256x128xbf16>
    %cst_12 = arith.constant dense<0.000000e+00> : vector<8x128xf32>
    %23 = tpu.matmul %21, %22, %cst_12 {dimension_numbers = #tpu.dot_dimension_numbers<[1], [0], [0], [1], [0, 0, 1, 1], [], []>} : vector<8x256xbf16>, vector<256x128xbf16>, vector<8x128xf32> -> vector<8x128xf32>
    %24 = arith.addf %2, %23 : vector<8x128xf32>
    %c0_13 = arith.constant 0 : index
    %c256 = arith.constant 256 : index
    %25 = vector.load %arg2[%c0_13, %c256] : memref<128x512xbf16, #tpu.memory_space<vmem>>, vector<128x256xbf16>
    %cst_14 = arith.constant dense<0.000000e+00> : vector<8x256xf32>
    %26 = tpu.matmul %1, %25, %cst_14 {dimension_numbers = #tpu.dot_dimension_numbers<[1], [0], [0], [1], [0, 0, 1, 1], [], []>} : vector<8x128xbf16>, vector<128x256xbf16>, vector<8x256xf32> -> vector<8x256xf32>
    %c0_15 = arith.constant 0 : index
    %c256_16 = arith.constant 256 : index
    %27 = vector.load %arg3[%c0_15, %c256_16] : memref<1x512xf32, #tpu.memory_space<vmem>>, vector<1x256xf32>
    %28 = vector.broadcast %27 : vector<1x256xf32> to vector<8x256xf32>
    %29 = arith.addf %26, %28 : vector<8x256xf32>
    %30 = arith.mulf %29, %29 : vector<8x256xf32>
    %31 = arith.mulf %29, %30 : vector<8x256xf32>
    %cst_17 = arith.constant 4.471500e-02 : f32
    %32 = vector.broadcast %cst_17 : f32 to vector<8x256xf32>
    %33 = arith.mulf %32, %31 : vector<8x256xf32>
    %34 = arith.addf %29, %33 : vector<8x256xf32>
    %cst_18 = arith.constant 0.797884583 : f32
    %35 = vector.broadcast %cst_18 : f32 to vector<8x256xf32>
    %36 = arith.mulf %35, %34 : vector<8x256xf32>
    %37 = math.tanh %36 : vector<8x256xf32>
    %cst_19 = arith.constant 1.000000e+00 : f32
    %38 = vector.broadcast %cst_19 : f32 to vector<8x256xf32>
    %39 = arith.addf %38, %37 : vector<8x256xf32>
    %cst_20 = arith.constant 5.000000e-01 : f32
    %40 = vector.broadcast %cst_20 : f32 to vector<8x256xf32>
    %41 = arith.mulf %40, %39 : vector<8x256xf32>
    %42 = arith.mulf %29, %41 : vector<8x256xf32>
    %43 = arith.truncf %42 : vector<8x256xf32> to vector<8x256xbf16>
    %c256_21 = arith.constant 256 : index
    %c0_22 = arith.constant 0 : index
    %44 = vector.load %arg4[%c256_21, %c0_22] : memref<512x128xbf16, #tpu.memory_space<vmem>>, vector<256x128xbf16>
    %cst_23 = arith.constant dense<0.000000e+00> : vector<8x128xf32>
    %45 = tpu.matmul %43, %44, %cst_23 {dimension_numbers = #tpu.dot_dimension_numbers<[1], [0], [0], [1], [0, 0, 1, 1], [], []>} : vector<8x256xbf16>, vector<256x128xbf16>, vector<8x128xf32> -> vector<8x128xf32>
    %46 = arith.addf %24, %45 : vector<8x128xf32>
    %c0_24 = arith.constant 0 : index
    %c0_25 = arith.constant 0 : index
    %47 = vector.load %arg5[%c0_24, %c0_25] : memref<1x128xf32, #tpu.memory_space<vmem>>, vector<1x128xf32>
    %48 = vector.broadcast %47 : vector<1x128xf32> to vector<8x128xf32>
    %49 = arith.addf %46, %48 : vector<8x128xf32>
    %50 = arith.addf %49, %0 : vector<8x128xf32>
    %c0_26 = arith.constant 0 : index
    %c0_27 = arith.constant 0 : index
    %51 = vector.load %arg6[%c0_26, %c0_27] : memref<8x128xf32, #tpu.memory_space<vmem>>, vector<8x128xf32>
    tpu.vector_store %arg6[%c0_26, %c0_27], %50 {strides = array<i32>} : memref<8x128xf32, #tpu.memory_space<vmem>>, vector<8x128xf32>,
    return
  }
  func.func @transform_0(%arg0: i32) -> (i32, i32) {
    %c0_i32 = arith.constant 0 : i32
    %c0_i32_0 = arith.constant 0 : i32
    return %arg0, %c0_i32 : i32, i32
  }
  func.func @transform_1(%arg0: i32) -> (i32, i32) {
    %c0_i32 = arith.constant 0 : i32
    %c0_i32_0 = arith.constant 0 : i32
    %c0_i32_1 = arith.constant 0 : i32
    return %c0_i32, %c0_i32_0 : i32, i32
  }
  func.func @transform_2(%arg0: i32) -> (i32, i32) {
    %c0_i32 = arith.constant 0 : i32
    %c0_i32_0 = arith.constant 0 : i32
    %c0_i32_1 = arith.constant 0 : i32
    return %c0_i32, %c0_i32_0 : i32, i32
  }
  func.func @transform_3(%arg0: i32) -> (i32, i32) {
    %c0_i32 = arith.constant 0 : i32
    %c0_i32_0 = arith.constant 0 : i32
    %c0_i32_1 = arith.constant 0 : i32
    return %c0_i32, %c0_i32_0 : i32, i32
  }
  func.func @transform_4(%arg0: i32) -> (i32, i32) {
    %c0_i32 = arith.constant 0 : i32
    %c0_i32_0 = arith.constant 0 : i32
    %c0_i32_1 = arith.constant 0 : i32
    return %c0_i32, %c0_i32_0 : i32, i32
  }
  func.func @transform_5(%arg0: i32) -> (i32, i32) {
    %c0_i32 = arith.constant 0 : i32
    %c0_i32_0 = arith.constant 0 : i32
    return %arg0, %c0_i32 : i32, i32
  }
}

</mosaic_0001>

<llo_original>
// kernel: tpu_custom_call.1
$region0: #{tpu_custom_call.1}
  #allocation0 [shape = 'u32[]', space=smem, size = 0x4, offset = 0x4, fixed_abs, tag = 'smem constant byte address 0x4 - core index']
  #allocation1 [shape = 'u32[144,128]{1,0:T(1,128)}', space=vmem, size = 0x12000, scoped, tag = 'internal scratch']
  %s0 = inlined_call_operand.hbm [shape: f32[16,128], index: 0, kind: input, shape index: {}]
  %s1 = inlined_call_operand.hbm [shape: bf16[128,512], index: 1, kind: input, shape index: {}]
  %s2 = inlined_call_operand.vmem [shape: f32[1,512], index: 2, kind: input, shape index: {}]
  %s3 = inlined_call_operand.hbm [shape: bf16[512,128], index: 3, kind: input, shape index: {}]
  %s4 = inlined_call_operand.vmem [shape: f32[1,128], index: 4, kind: input, shape index: {}]
  %s5 = inlined_call_operand.hbm [shape: f32[16,128], index: 5, kind: output, shape index: {}]
  %s6 = sld [smem:[#allocation0]]
  $region65: #{tpu_custom_call.1} parent=0
    _
  %s8 = ssub.s32 1, %s6
  %s9 = scalar_select 0, %s8, %s6
  $region1: #{tpu_custom_call.1} parent=0
    #allocation2 [shape = 'u8[8192]{0}', space=vmem, size = 0x2000, scoped, tag = 'input window, operand 0']
    #allocation3 [shape = 's32[2]{0}', space=sflag, size = 0x8, scoped, tag = 'scoped memory for tpu_custom_call.1']
    #allocation4 [shape = 's32[2]{0}', space=sflag, size = 0x8, scoped, tag = 'scoped memory for tpu_custom_call.1']
    #allocation5 [shape = 'u8[131072]{0}', space=vmem, size = 0x20000, scoped, tag = 'input window, operand 1, single buffered']
    #allocation6 [shape = 's32[1]{0}', space=sflag, size = 0x4, scoped, tag = 'scoped memory for tpu_custom_call.1']
    #allocation7 [shape = 'u8[131072]{0}', space=vmem, size = 0x20000, scoped, tag = 'input window, operand 3, single buffered']
    #allocation8 [shape = 'u8[8192]{0}', space=vmem, size = 0x2000, scoped, tag = 'output window, operand 0']
    %10 = vsyncpa [#allocation3], 0
    %s11 = scalar_lea.sflag [#allocation3], 1
    %12 = vsyncpa %s11, 0
    %13 = vsyncpa [#allocation6], 0
    %14 = vsyncpa [#allocation4], 0
    %s15 = scalar_lea.sflag [#allocation4], 1
    %16 = vsyncpa %s15, 0
    loop: start=0, step=1, limit=4
    $region2: #{tpu_custom_call.1} parent=1 // loop_pre_header
      _
    $region3: #{tpu_custom_call.1} parent=1 // loop_header
      %s18 = sphi 0, %s22
      %p19 = scmp.ge.s32.totalorder %s18, 4
      %s28 = sphi 0, %s30
      %s31 = sphi 0, %s28
      %s32 = sphi 0, %s31
      %s48 = sphi 0, %s32
      %s52 = sphi 0, %s52
      %s54 = sphi 0, %s52
      %s55 = sphi 0, %s54
      %s69 = sphi 0, %s55
      %s73 = sphi 0, %s73
      %s75 = sphi 0, %s73
      %s76 = sphi 0, %s75
      %s90 = sphi 0, %s76
      %s94 = sphi 0, %s94
      %s96 = sphi 0, %s94
      %s97 = sphi 0, %s96
      %s111 = sphi 0, %s97
      %s115 = sphi 0, %s115
      %s117 = sphi 0, %s115
      %s118 = sphi 0, %s117
      %s132 = sphi 0, %s118
      %s138 = sphi 0, %s140
      %s141 = sphi 0, %s138
      %s142 = sphi 0, %s141
      %s158 = sphi 0, %s142
    $region4: #{tpu_custom_call.1} parent=1 // loop_header_branch
      %21 = sbr.rel (%p19) target = $region8
    $region5: #{tpu_custom_call.1} parent=1 // loop_body
      %s23 = ssub.s32 %s18, 1
      %s24 = ssub.s32 %s18, 2
      %s25 = sadd.s32 %s18, 1
      %s26 = ssub.s32 %s18, %s25
      %p27 = scmp.eq.s32.totalorder %s26, 0
      %s29 = sadd.s32 %s28, 1
      %s30 = scalar_select %p27, %s28, %s29
      %p33 = pneg %p27
      %p34 = scmp.eq.s32.totalorder %s18, 1
      %p35 = por %p33, %p34
      %p36 = scmp.ne.s32.totalorder %s28, %s31
      %p37 = scmp.eq.s32.totalorder %s18, 0
      %p38 = por %p36, %p37
      %p39 = scmp.ne.s32.totalorder %s28, %s31
      %p40 = scmp.eq.s32.totalorder %s23, 1
      %p41 = por %p39, %p40
      %p42 = scmp.ne.s32.totalorder %s31, %s32
      %p43 = scmp.eq.s32.totalorder %s23, 0
      %p44 = por %p42, %p43
      %p45 = scmp.ne.s32.totalorder %s31, %s32
      %p46 = scmp.eq.s32.totalorder %s24, 1
      %p47 = por %p45, %p46
      %p49 = scmp.ne.s32.totalorder %s32, %s48
      %p50 = scmp.eq.s32.totalorder %s24, 0
      %p51 = por %p49, %p50
      %s53 = sadd.s32 %s52, 1
      %p56 = scmp.eq.s32.totalorder %s18, 1
      %p57 = scmp.ne.s32.totalorder %s52, %s54
      %p58 = scmp.eq.s32.totalorder %s18, 0
      %p59 = por %p57, %p58
      %p60 = scmp.ne.s32.totalorder %s52, %s54
      %p61 = scmp.eq.s32.totalorder %s23, 1
      %p62 = por %p60, %p61
      %p63 = scmp.ne.s32.totalorder %s54, %s55
      %p64 = scmp.eq.s32.totalorder %s23, 0
      %p65 = por %p63, %p64
      %p66 = scmp.ne.s32.totalorder %s54, %s55
      %p67 = scmp.eq.s32.totalorder %s24, 1
      %p68 = por %p66, %p67
      %p70 = scmp.ne.s32.totalorder %s55, %s69
      %p71 = scmp.eq.s32.totalorder %s24, 0
      %p72 = por %p70, %p71
      %s74 = sadd.s32 %s73, 1
      %p77 = scmp.eq.s32.totalorder %s18, 1
      %p78 = scmp.ne.s32.totalorder %s73, %s75
      %p79 = scmp.eq.s32.totalorder %s18, 0
      %p80 = por %p78, %p79
      %p81 = scmp.ne.s32.totalorder %s73, %s75
      %p82 = scmp.eq.s32.totalorder %s23, 1
      %p83 = por %p81, %p82
      %p84 = scmp.ne.s32.totalorder %s75, %s76
      %p85 = scmp.eq.s32.totalorder %s23, 0
      %p86 = por %p84, %p85
      %p87 = scmp.ne.s32.totalorder %s75, %s76
      %p88 = scmp.eq.s32.totalorder %s24, 1
      %p89 = por %p87, %p88
      %p91 = scmp.ne.s32.totalorder %s76, %s90
      %p92 = scmp.eq.s32.totalorder %s24, 0
      %p93 = por %p91, %p92
      %s95 = sadd.s32 %s94, 1
      %p98 = scmp.eq.s32.totalorder %s18, 1
      %p99 = scmp.ne.s32.totalorder %s94, %s96
      %p100 = scmp.eq.s32.totalorder %s18, 0
      %p101 = por %p99, %p100
      %p102 = scmp.ne.s32.totalorder %s94, %s96
      %p103 = scmp.eq.s32.totalorder %s23, 1
      %p104 = por %p102, %p103
      %p105 = scmp.ne.s32.totalorder %s96, %s97
      %p106 = scmp.eq.s32.totalorder %s23, 0
      %p107 = por %p105, %p106
      %p108 = scmp.ne.s32.totalorder %s96, %s97
      %p109 = scmp.eq.s32.totalorder %s24, 1
      %p110 = por %p108, %p109
      %p112 = scmp.ne.s32.totalorder %s97, %s111
      %p113 = scmp.eq.s32.totalorder %s24, 0
      %p114 = por %p112, %p113
      %s116 = sadd.s32 %s115, 1
      %p119 = scmp.eq.s32.totalorder %s18, 1
      %p120 = scmp.ne.s32.totalorder %s115, %s117
      %p121 = scmp.eq.s32.totalorder %s18, 0
      %p122 = por %p120, %p121
      %p123 = scmp.ne.s32.totalorder %s115, %s117
      %p124 = scmp.eq.s32.totalorder %s23, 1
      %p125 = por %p123, %p124
      %p126 = scmp.ne.s32.totalorder %s117, %s118
      %p127 = scmp.eq.s32.totalorder %s23, 0
      %p128 = por %p126, %p127
      %p129 = scmp.ne.s32.totalorder %s117, %s118
      %p130 = scmp.eq.s32.totalorder %s24, 1
      %p131 = por %p129, %p130
      %p133 = scmp.ne.s32.totalorder %s118, %s132
      %p134 = scmp.eq.s32.totalorder %s24, 0
      %p135 = por %p133, %p134
      %s136 = ssub.s32 %s18, %s25
      %p137 = scmp.eq.s32.totalorder %s136, 0
      %s139 = sadd.s32 %s138, 1
      %s140 = scalar_select %p137, %s138, %s139
      %p143 = pneg %p137
      %p144 = scmp.eq.s32.totalorder %s18, 1
      %p145 = por %p143, %p144
      %p146 = scmp.ne.s32.totalorder %s138, %s141
      %p147 = scmp.eq.s32.totalorder %s18, 0
      %p148 = por %p146, %p147
      %p149 = scmp.ne.s32.totalorder %s138, %s141
      %p150 = scmp.eq.s32.totalorder %s23, 1
      %p151 = por %p149, %p150
      %p152 = scmp.ne.s32.totalorder %s141, %s142
      %p153 = scmp.eq.s32.totalorder %s23, 0
      %p154 = por %p152, %p153
      %p155 = scmp.ne.s32.totalorder %s141, %s142
      %p156 = scmp.eq.s32.totalorder %s24, 1
      %p157 = por %p155, %p156
      %p159 = scmp.ne.s32.totalorder %s142, %s158
      %p160 = scmp.eq.s32.totalorder %s24, 0
      %p161 = por %p159, %p160
      %p162 = scmp.le.s32.totalorder 1, %s18
      %p163 = scmp.lt.s32.totalorder %s18, 3
      %p164 = pnand %p162, %p163
      %p165 = pneg %p164
      // Predicated region
      $region9: #{tpu_custom_call.1} parent=5 // pred_check
        _
      $region10: #{tpu_custom_call.1} parent=5 // pred_check_branch
        %167 = sbr.rel (%p164) target = $region12
      $region11: #{tpu_custom_call.1} parent=5 // pred_region
        %s168 = ssub.s32 %s18, 1
        // Predicated region
        $region13: #{tpu_custom_call.1} parent=11 // pred_check
          %p169 = pneg %p65
        $region14: #{tpu_custom_call.1} parent=11 // pred_check_branch
          %171 = sbr.rel (%p169) target = $region16
        $region15: #{tpu_custom_call.1} parent=11 // pred_region
          %s173 = ssub.s32 4096, 4096
          %174 = vsyncadd [#allocation6], %s173
          %s175 = sshll.u32 [#allocation5], 4
          %s176 = int_to_ptr.vmem [resolvable:$true] %s175
          %181 = dma.hbm_to_vmem [thread:$0]  %s1, 4096, %s176, [#allocation6], 256, 256, 16
        $region16: #{tpu_custom_call.1} parent=11 // pred_fallthru
          _
        // Predicated region
        $region17: #{tpu_custom_call.1} parent=11 // pred_check
          %p182 = pneg %p86
        $region18: #{tpu_custom_call.1} parent=11 // pred_check_branch
          %184 = sbr.rel (%p182) target = $region20
        $region19: #{tpu_custom_call.1} parent=11 // pred_region
          _
        $region20: #{tpu_custom_call.1} parent=11 // pred_fallthru
          _
        // Predicated region
        $region21: #{tpu_custom_call.1} parent=11 // pred_check
          %p185 = pneg %p107
        $region22: #{tpu_custom_call.1} parent=11 // pred_check_branch
          %187 = sbr.rel (%p185) target = $region24
        $region23: #{tpu_custom_call.1} parent=11 // pred_region
          %s189 = ssub.s32 4096, 4096
          %190 = vsyncadd [#allocation6], %s189
          %s191 = sshll.u32 [#allocation7], 4
          %s192 = int_to_ptr.vmem [resolvable:$true] %s191
          %197 = dma.hbm_to_vmem [thread:$0]  %s3, 4096, %s192, [#allocation6], 64, 64, 4
        $region24: #{tpu_custom_call.1} parent=11 // pred_fallthru
          _
        // Predicated region
        $region25: #{tpu_custom_call.1} parent=11 // pred_check
          %p198 = pneg %p128
        $region26: #{tpu_custom_call.1} parent=11 // pred_check_branch
          %200 = sbr.rel (%p198) target = $region28
        $region27: #{tpu_custom_call.1} parent=11 // pred_region
          _
        $region28: #{tpu_custom_call.1} parent=11 // pred_fallthru
          _
      $region12: #{tpu_custom_call.1} parent=5 // pred_fallthru
        _
      %p201 = scmp.lt.s32.totalorder %s18, 2
      // Predicated region
      $region29: #{tpu_custom_call.1} parent=5 // pred_check
        %p202 = pneg %p201
      $region30: #{tpu_custom_call.1} parent=5 // pred_check_branch
        %204 = sbr.rel (%p202) target = $region32
      $region31: #{tpu_custom_call.1} parent=5 // pred_region
        // Predicated region
        $region33: #{tpu_custom_call.1} parent=31 // pred_check
          %p205 = pneg %p38
        $region34: #{tpu_custom_call.1} parent=31 // pred_check_branch
          %207 = sbr.rel (%p205) target = $region36
        $region35: #{tpu_custom_call.1} parent=31 // pred_region
          %s208 = sand.u32 %s28, 1
          %s209 = scalar_lea.sflag [#allocation3], %s208
          %s210 = sand.u32 %s28, 1
          %s211 = smul.addr %s210, 8
          %s212 = scalar_lea.vmem [#allocation2], %s211
          %s214 = ssub.s32 128, 128
          %215 = vsyncadd %s209, %s214
          %s216 = smul.addr %s18, 128
          %s217 = scalar_lea.hbm %s0, %s216
          %s219 = sshll.u32 %s212, 4
          %s220 = int_to_ptr.vmem [resolvable:$true] %s219
          %222 = dma.hbm_to_vmem [thread:$0]  %s217, 128, %s220, %s209
        $region36: #{tpu_custom_call.1} parent=31 // pred_fallthru
          _
      $region32: #{tpu_custom_call.1} parent=5 // pred_fallthru
        _
      %p223 = scmp.le.s32.totalorder 1, %s18
      %p224 = scmp.lt.s32.totalorder %s18, 3
      %p225 = pnand %p223, %p224
      %p226 = pneg %p225
      // Predicated region
      $region37: #{tpu_custom_call.1} parent=5 // pred_check
        _
      $region38: #{tpu_custom_call.1} parent=5 // pred_check_branch
        %228 = sbr.rel (%p225) target = $region40
      $region39: #{tpu_custom_call.1} parent=5 // pred_region
        %s229 = ssub.s32 %s18, 1
        %s230 = sand.u32 %s31, 1
        %s231 = scalar_lea.sflag [#allocation3], %s230
        %s232 = sand.u32 %s31, 1
        %s233 = smul.addr %s232, 8
        %s234 = scalar_lea.vmem [#allocation2], %s233
        // Predicated region
        $region41: #{tpu_custom_call.1} parent=39 // pred_check
          %p235 = pneg %p44
        $region42: #{tpu_custom_call.1} parent=39 // pred_check_branch
          %237 = sbr.rel (%p235) target = $region44
        $region43: #{tpu_custom_call.1} parent=39 // pred_region
          %238 = dma.done %s231, 128
        $region44: #{tpu_custom_call.1} parent=39 // pred_fallthru
          _
        // Predicated region
        $region45: #{tpu_custom_call.1} parent=39 // pred_check
          %p239 = pneg %p65
        $region46: #{tpu_custom_call.1} parent=39 // pred_check_branch
          %241 = sbr.rel (%p239) target = $region48
        $region47: #{tpu_custom_call.1} parent=39 // pred_region
          %242 = dma.done [#allocation6], 4096
        $region48: #{tpu_custom_call.1} parent=39 // pred_fallthru
          _
        // Predicated region
        $region49: #{tpu_custom_call.1} parent=39 // pred_check
          %p243 = pneg %p107
        $region50: #{tpu_custom_call.1} parent=39 // pred_check_branch
          %245 = sbr.rel (%p243) target = $region52
        $region51: #{tpu_custom_call.1} parent=39 // pred_region
          %246 = dma.done [#allocation6], 4096
        $region52: #{tpu_custom_call.1} parent=39 // pred_fallthru
          _
        %s247 = sand.u32 %s31, 1
        %s248 = scalar_lea.sflag [#allocation3], %s247
        %s249 = sand.u32 %s31, 1
        %s250 = smul.addr %s249, 8
        %s251 = scalar_lea.vmem [#allocation2], %s250
        %p252 = pneg %p44
        %p253 = pneg %p41
        %p254 = pneg %p65
        %p255 = pneg %p62
        %p256 = pneg %p86
        %p257 = pneg %p83
        %p258 = pneg %p107
        %p259 = pneg %p104
        %p260 = pneg %p128
        %p261 = pneg %p125
        %p262 = pneg %p154
        %p263 = pneg %p151
        %s264 = sand.u32 %s141, 1
        %s265 = scalar_lea.sflag [#allocation4], %s264
        %s266 = sand.u32 %s141, 1
        %s267 = smul.addr %s266, 8
        %s268 = scalar_lea.vmem [#allocation8], %s267
        %v270 = vld [vmem:[%s234] sm:$0xff]
        %v271 = vpack.c.bf16 %v270, %v270
        %v272 = vld [vmem:[#allocation5] sm:$0xff]
        %v273 = vld [vmem:[#allocation5 + $0x10] sm:$0xff]
        %v274 = vld [vmem:[#allocation5 + $0x20] sm:$0xff]
        %v275 = vld [vmem:[#allocation5 + $0x30] sm:$0xff]
        %v276 = vld [vmem:[#allocation5 + $0x40] sm:$0xff]
        %v277 = vld [vmem:[#allocation5 + $0x50] sm:$0xff]
        %v278 = vld [vmem:[#allocation5 + $0x60] sm:$0xff]
        %v279 = vld [vmem:[#allocation5 + $0x70] sm:$0xff]
        %v280 = vld [vmem:[#allocation5 + $0x80] sm:$0xff]
        %v281 = vld [vmem:[#allocation5 + $0x90] sm:$0xff]
        %v282 = vld [vmem:[#allocation5 + $0xa0] sm:$0xff]
        %v283 = vld [vmem:[#allocation5 + $0xb0] sm:$0xff]
        %v284 = vld [vmem:[#allocation5 + $0xc0] sm:$0xff]
        %v285 = vld [vmem:[#allocation5 + $0xd0] sm:$0xff]
        %v286 = vld [vmem:[#allocation5 + $0xe0] sm:$0xff]
        %v287 = vld [vmem:[#allocation5 + $0xf0] sm:$0xff]
        %v288 = vld [vmem:[%s2] sm:$0x3]
        %v290 = vlaneseq
        %v291 = vshrl.u32 %v290, 7
        %v292 = vsub.s32 0, %v291
        %v293 = vrot.slane %v288, %v292
        %v294 = vlaneseq
        %v295 = vshrl.u32 %v294, 7
        %v296 = vsub.s32 1, %v295
        %v297 = vrot.slane %v288, %v296
        %v316 = vunpack.c.l.b16 %v272
        %v317 = vunpack.c.h.b16 %v272
        %v318 = vunpack.c.l.b16 %v273
        %v319 = vunpack.c.h.b16 %v273
        %v320 = vunpack.c.l.b16 %v274
        %v321 = vunpack.c.h.b16 %v274
        %v322 = vunpack.c.l.b16 %v275
        %v323 = vunpack.c.h.b16 %v275
        %v324 = vunpack.c.l.b16 %v276
        %v325 = vunpack.c.h.b16 %v276
        %v326 = vunpack.c.l.b16 %v277
        %v327 = vunpack.c.h.b16 %v277
        %v328 = vunpack.c.l.b16 %v278
        %v329 = vunpack.c.h.b16 %v278
        %v330 = vunpack.c.l.b16 %v279
        %v331 = vunpack.c.h.b16 %v279
        %v332 = vunpack.c.l.b16 %v280
        %v333 = vunpack.c.h.b16 %v280
        %v334 = vunpack.c.l.b16 %v281
        %v335 = vunpack.c.h.b16 %v281
        %v336 = vunpack.c.l.b16 %v282
        %v337 = vunpack.c.h.b16 %v282
        %v338 = vunpack.c.l.b16 %v283
        %v339 = vunpack.c.h.b16 %v283
        %v340 = vunpack.c.l.b16 %v284
        %v341 = vunpack.c.h.b16 %v284
        %v342 = vunpack.c.l.b16 %v285
        %v343 = vunpack.c.h.b16 %v285
        %v344 = vunpack.c.l.b16 %v286
        %v345 = vunpack.c.h.b16 %v286
        %v346 = vunpack.c.l.b16 %v287
        %v347 = vunpack.c.h.b16 %v287
        %v348 = vpack.c.b16 %v318, %v316
        %v349 = vpack.c.b16 %v319, %v317
        %v350 = vpack.c.b16 %v322, %v320
        %v351 = vpack.c.b16 %v323, %v321
        %v352 = vpack.c.b16 %v326, %v324
        %v353 = vpack.c.b16 %v327, %v325
        %v354 = vpack.c.b16 %v330, %v328
        %v355 = vpack.c.b16 %v331, %v329
        %v356 = vpack.c.b16 %v334, %v332
        %v357 = vpack.c.b16 %v335, %v333
        %v358 = vpack.c.b16 %v338, %v336
        %v359 = vpack.c.b16 %v339, %v337
        %v360 = vpack.c.b16 %v342, %v340
        %v361 = vpack.c.b16 %v343, %v341
        %v362 = vpack.c.b16 %v346, %v344
        %v363 = vpack.c.b16 %v347, %v345
        %380 = vmatprep.subr.bf16.mxu0 %v349
        %381 = vmatpush1.bf16.msra.mxu0 %v348
        %382 = vmatprep.subr.bf16.mxu0 %v351
        %383 = vmatpush1.bf16.msra.mxu0 %v350
        %384 = vmatprep.subr.bf16.mxu0 %v353
        %385 = vmatpush1.bf16.msra.mxu0 %v352
        %386 = vmatprep.subr.bf16.mxu0 %v355
        %387 = vmatpush1.bf16.msra.mxu0 %v354
        %388 = vmatprep.subr.bf16.mxu0 %v357
        %389 = vmatpush1.bf16.msra.mxu0 %v356
        %390 = vmatprep.subr.bf16.mxu0 %v359
        %391 = vmatpush1.bf16.msra.mxu0 %v358
        %392 = vmatprep.subr.bf16.mxu0 %v361
        %393 = vmatpush1.bf16.msra.mxu0 %v360
        %394 = vmatprep.subr.bf16.mxu0 %v363
        %395 = vmatpush1.bf16.msra.mxu0 %v362
        %396 = vmatprep.subr.bf16.mxu0 0
        %397 = vmatpush1.bf16.msra.mxu0 0
        %398 = vmatprep.subr.bf16.mxu0 0
        %399 = vmatpush1.bf16.msra.mxu0 0
        %400 = vmatprep.subr.bf16.mxu0 0
        %401 = vmatpush1.bf16.msra.mxu0 0
        %402 = vmatprep.subr.bf16.mxu0 0
        %403 = vmatpush1.bf16.msra.mxu0 0
        %404 = vmatprep.subr.bf16.mxu0 0
        %405 = vmatpush1.bf16.msra.mxu0 0
        %406 = vmatprep.subr.bf16.mxu0 0
        %407 = vmatpush1.bf16.msra.mxu0 0
        %408 = vmatprep.subr.bf16.mxu0 0
        %409 = vmatpush1.bf16.msra.mxu0 0
        %410 = vmatprep.subr.bf16.mxu0 0
        %411 = vmatpush1.bf16.msra.mxu0 0
        %412 = vmatprep.mubr.bf16.mxu0 0
        %413 = vmatmul.mubr.bf16.gmra.mrb[0].mxu0 %v271
        %v414 = vpop.f32.mrb[0].mxu0
        %v415 = vadd.f32 %v293, %v414
        %v416 = vpop.f32.mrb[0].mxu0
        %v417 = vadd.f32 %v297, %v416
        %v418 = vpop.f32.mrb[0].mxu0
        %v419 = vpop.f32.mrb[0].mxu0
        %420 = vdwg.mxu0
        %v421 = vmul.f32 %v415, %v415
        %v422 = vmul.f32 %v417, %v417
        %v423 = vmul.f32 %v415, %v421
        %v424 = vmul.f32 %v417, %v422
        %v425 = vmul.f32 %v423, 0.044715
        %v426 = vmul.f32 %v424, 0.044715
        %v427 = vadd.f32 %v415, %v425
        %v428 = vadd.f32 %v417, %v426
        %v429 = vmul.f32 %v427, 0.7978846
        %v430 = vmul.f32 %v428, 0.7978846
        %v431 = vtanh.pop %v429
        %v432 = vtanh.pop %v430
        %v433 = vadd.f32 %v431, 1.0
        %v434 = vadd.f32 %v432, 1.0
        %v435 = vmul.f32 %v433, 0.5
        %v436 = vmul.f32 %v434, 0.5
        %v437 = vmul.f32 %v415, %v435
        %v438 = vmul.f32 %v417, %v436
        %v439 = vpack.c.bf16 %v437, %v437
        %v440 = vpack.c.bf16 %v438, %v438
        %v441 = vld [vmem:[#allocation7] sm:$0xf]
        %v442 = vld [vmem:[#allocation7 + $0x4] sm:$0xf]
        %v443 = vld [vmem:[#allocation7 + $0x8] sm:$0xf]
        %v444 = vld [vmem:[#allocation7 + $0xc] sm:$0xf]
        %v445 = vld [vmem:[#allocation7 + $0x10] sm:$0xf]
        %v446 = vld [vmem:[#allocation7 + $0x14] sm:$0xf]
        %v447 = vld [vmem:[#allocation7 + $0x18] sm:$0xf]
        %v448 = vld [vmem:[#allocation7 + $0x1c] sm:$0xf]
        %v449 = vld [vmem:[#allocation7 + $0x20] sm:$0xf]
        %v450 = vld [vmem:[#allocation7 + $0x24] sm:$0xf]
        %v451 = vld [vmem:[#allocation7 + $0x28] sm:$0xf]
        %v452 = vld [vmem:[#allocation7 + $0x2c] sm:$0xf]
        %v453 = vld [vmem:[#allocation7 + $0x30] sm:$0xf]
        %v454 = vld [vmem:[#allocation7 + $0x34] sm:$0xf]
        %v455 = vld [vmem:[#allocation7 + $0x38] sm:$0xf]
        %v456 = vld [vmem:[#allocation7 + $0x3c] sm:$0xf]
        %v457 = vld [vmem:[#allocation7 + $0x40] sm:$0xf]
        %v458 = vld [vmem:[#allocation7 + $0x44] sm:$0xf]
        %v459 = vld [vmem:[#allocation7 + $0x48] sm:$0xf]
        %v460 = vld [vmem:[#allocation7 + $0x4c] sm:$0xf]
        %v461 = vld [vmem:[#allocation7 + $0x50] sm:$0xf]
        %v462 = vld [vmem:[#allocation7 + $0x54] sm:$0xf]
        %v463 = vld [vmem:[#allocation7 + $0x58] sm:$0xf]
        %v464 = vld [vmem:[#allocation7 + $0x5c] sm:$0xf]
        %v465 = vld [vmem:[#allocation7 + $0x60] sm:$0xf]
        %v466 = vld [vmem:[#allocation7 + $0x64] sm:$0xf]
        %v467 = vld [vmem:[#allocation7 + $0x68] sm:$0xf]
        %v468 = vld [vmem:[#allocation7 + $0x6c] sm:$0xf]
        %v469 = vld [vmem:[#allocation7 + $0x70] sm:$0xf]
        %v470 = vld [vmem:[#allocation7 + $0x74] sm:$0xf]
        %v471 = vld [vmem:[#allocation7 + $0x78] sm:$0xf]
        %v472 = vld [vmem:[#allocation7 + $0x7c] sm:$0xf]
        %v473 = vld [vmem:[#allocation5 + $0x8] sm:$0xff]
        %v474 = vld [vmem:[#allocation5 + $0x18] sm:$0xff]
        %v475 = vld [vmem:[#allocation5 + $0x28] sm:$0xff]
        %v476 = vld [vmem:[#allocation5 + $0x38] sm:$0xff]
        %v477 = vld [vmem:[#allocation5 + $0x48] sm:$0xff]
        %v478 = vld [vmem:[#allocation5 + $0x58] sm:$0xff]
        %v479 = vld [vmem:[#allocation5 + $0x68] sm:$0xff]
        %v480 = vld [vmem:[#allocation5 + $0x78] sm:$0xff]
        %v481 = vld [vmem:[#allocation5 + $0x88] sm:$0xff]
        %v482 = vld [vmem:[#allocation5 + $0x98] sm:$0xff]
        %v483 = vld [vmem:[#allocation5 + $0xa8] sm:$0xff]
        %v484 = vld [vmem:[#allocation5 + $0xb8] sm:$0xff]
        %v485 = vld [vmem:[#allocation5 + $0xc8] sm:$0xff]
        %v486 = vld [vmem:[#allocation5 + $0xd8] sm:$0xff]
        %v487 = vld [vmem:[#allocation5 + $0xe8] sm:$0xff]
        %v488 = vld [vmem:[#allocation5 + $0xf8] sm:$0xff]
        %v489 = vld [vmem:[%s2 + $0x2] sm:$0x3]
        %v491 = vlaneseq
        %v492 = vshrl.u32 %v491, 7
        %v493 = vsub.s32 0, %v492
        %v494 = vrot.slane %v489, %v493
        %v495 = vlaneseq
        %v496 = vshrl.u32 %v495, 7
        %v497 = vsub.s32 1, %v496
        %v498 = vrot.slane %v489, %v497
        %v517 = vunpack.c.l.b16 %v473
        %v518 = vunpack.c.h.b16 %v473
        %v519 = vunpack.c.l.b16 %v474
        %v520 = vunpack.c.h.b16 %v474
        %v521 = vunpack.c.l.b16 %v475
        %v522 = vunpack.c.h.b16 %v475
        %v523 = vunpack.c.l.b16 %v476
        %v524 = vunpack.c.h.b16 %v476
        %v525 = vunpack.c.l.b16 %v477
        %v526 = vunpack.c.h.b16 %v477
        %v527 = vunpack.c.l.b16 %v478
        %v528 = vunpack.c.h.b16 %v478
        %v529 = vunpack.c.l.b16 %v479
        %v530 = vunpack.c.h.b16 %v479
        %v531 = vunpack.c.l.b16 %v480
        %v532 = vunpack.c.h.b16 %v480
        %v533 = vunpack.c.l.b16 %v481
        %v534 = vunpack.c.h.b16 %v481
        %v535 = vunpack.c.l.b16 %v482
        %v536 = vunpack.c.h.b16 %v482
        %v537 = vunpack.c.l.b16 %v483
        %v538 = vunpack.c.h.b16 %v483
        %v539 = vunpack.c.l.b16 %v484
        %v540 = vunpack.c.h.b16 %v484
        %v541 = vunpack.c.l.b16 %v485
        %v542 = vunpack.c.h.b16 %v485
        %v543 = vunpack.c.l.b16 %v486
        %v544 = vunpack.c.h.b16 %v486
        %v545 = vunpack.c.l.b16 %v487
        %v546 = vunpack.c.h.b16 %v487
        %v547 = vunpack.c.l.b16 %v488
        %v548 = vunpack.c.h.b16 %v488
        %v549 = vpack.c.b16 %v519, %v517
        %v550 = vpack.c.b16 %v520, %v518
        %v551 = vpack.c.b16 %v523, %v521
        %v552 = vpack.c.b16 %v524, %v522
        %v553 = vpack.c.b16 %v527, %v525
        %v554 = vpack.c.b16 %v528, %v526
        %v555 = vpack.c.b16 %v531, %v529
        %v556 = vpack.c.b16 %v532, %v530
        %v557 = vpack.c.b16 %v535, %v533
        %v558 = vpack.c.b16 %v536, %v534
        %v559 = vpack.c.b16 %v539, %v537
        %v560 = vpack.c.b16 %v540, %v538
        %v561 = vpack.c.b16 %v543, %v541
        %v562 = vpack.c.b16 %v544, %v542
        %v563 = vpack.c.b16 %v547, %v545
        %v564 = vpack.c.b16 %v548, %v546
        %581 = vmatprep.subr.bf16.mxu0 %v550
        %582 = vmatpush1.bf16.msra.mxu0 %v549
        %583 = vmatprep.subr.bf16.mxu0 %v552
        %584 = vmatpush1.bf16.msra.mxu0 %v551
        %585 = vmatprep.subr.bf16.mxu0 %v554
        %586 = vmatpush1.bf16.msra.mxu0 %v553
        %587 = vmatprep.subr.bf16.mxu0 %v556
        %588 = vmatpush1.bf16.msra.mxu0 %v555
        %589 = vmatprep.subr.bf16.mxu0 %v558
        %590 = vmatpush1.bf16.msra.mxu0 %v557
        %591 = vmatprep.subr.bf16.mxu0 %v560
        %592 = vmatpush1.bf16.msra.mxu0 %v559
        %593 = vmatprep.subr.bf16.mxu0 %v562
        %594 = vmatpush1.bf16.msra.mxu0 %v561
        %595 = vmatprep.subr.bf16.mxu0 %v564
        %596 = vmatpush1.bf16.msra.mxu0 %v563
        %597 = vmatprep.subr.bf16.mxu0 0
        %598 = vmatpush1.bf16.msra.mxu0 0
        %599 = vmatprep.subr.bf16.mxu0 0
        %600 = vmatpush1.bf16.msra.mxu0 0
        %601 = vmatprep.subr.bf16.mxu0 0
        %602 = vmatpush1.bf16.msra.mxu0 0
        %603 = vmatprep.subr.bf16.mxu0 0
        %604 = vmatpush1.bf16.msra.mxu0 0
        %605 = vmatprep.subr.bf16.mxu0 0
        %606 = vmatpush1.bf16.msra.mxu0 0
        %607 = vmatprep.subr.bf16.mxu0 0
        %608 = vmatpush1.bf16.msra.mxu0 0
        %609 = vmatprep.subr.bf16.mxu0 0
        %610 = vmatpush1.bf16.msra.mxu0 0
        %611 = vmatprep.subr.bf16.mxu0 0
        %612 = vmatpush1.bf16.msra.mxu0 0
        %613 = vmatprep.mubr.bf16.mxu0 0
        %614 = vmatmul.mubr.bf16.gmra.mrb[0].mxu0 %v271
        %v615 = vpop.f32.mrb[0].mxu0
        %v616 = vadd.f32 %v494, %v615
        %v617 = vpop.f32.mrb[0].mxu0
        %v618 = vadd.f32 %v498, %v617
        %v619 = vpop.f32.mrb[0].mxu0
        %v620 = vpop.f32.mrb[0].mxu0
        %621 = vdwg.mxu0
        %v622 = vmul.f32 %v616, %v616
        %v623 = vmul.f32 %v618, %v618
        %v624 = vmul.f32 %v616, %v622
        %v625 = vmul.f32 %v618, %v623
        %v626 = vmul.f32 %v624, 0.044715
        %v627 = vmul.f32 %v625, 0.044715
        %v628 = vadd.f32 %v616, %v626
        %v629 = vadd.f32 %v618, %v627
        %v630 = vmul.f32 %v628, 0.7978846
        %v631 = vmul.f32 %v629, 0.7978846
        %v632 = vtanh.pop %v630
        %v633 = vtanh.pop %v631
        %v634 = vadd.f32 %v632, 1.0
        %v635 = vadd.f32 %v633, 1.0
        %v636 = vmul.f32 %v634, 0.5
        %v637 = vmul.f32 %v635, 0.5
        %v638 = vmul.f32 %v616, %v636
        %v639 = vmul.f32 %v618, %v637
        %v640 = vpack.c.bf16 %v638, %v638
        %v641 = vpack.c.bf16 %v639, %v639
        %v642 = vld [vmem:[#allocation7 + $0x80] sm:$0xf]
        %v643 = vld [vmem:[#allocation7 + $0x84] sm:$0xf]
        %v644 = vld [vmem:[#allocation7 + $0x88] sm:$0xf]
        %v645 = vld [vmem:[#allocation7 + $0x8c] sm:$0xf]
        %v646 = vld [vmem:[#allocation7 + $0x90] sm:$0xf]
        %v647 = vld [vmem:[#allocation7 + $0x94] sm:$0xf]
        %v648 = vld [vmem:[#allocation7 + $0x98] sm:$0xf]
        %v649 = vld [vmem:[#allocation7 + $0x9c] sm:$0xf]
        %v650 = vld [vmem:[#allocation7 + $0xa0] sm:$0xf]
        %v651 = vld [vmem:[#allocation7 + $0xa4] sm:$0xf]
        %v652 = vld [vmem:[#allocation7 + $0xa8] sm:$0xf]
        %v653 = vld [vmem:[#allocation7 + $0xac] sm:$0xf]
        %v654 = vld [vmem:[#allocation7 + $0xb0] sm:$0xf]
        %v655 = vld [vmem:[#allocation7 + $0xb4] sm:$0xf]
        %v656 = vld [vmem:[#allocation7 + $0xb8] sm:$0xf]
        %v657 = vld [vmem:[#allocation7 + $0xbc] sm:$0xf]
        %v658 = vld [vmem:[#allocation7 + $0xc0] sm:$0xf]
        %v659 = vld [vmem:[#allocation7 + $0xc4] sm:$0xf]
        %v660 = vld [vmem:[#allocation7 + $0xc8] sm:$0xf]
        %v661 = vld [vmem:[#allocation7 + $0xcc] sm:$0xf]
        %v662 = vld [vmem:[#allocation7 + $0xd0] sm:$0xf]
        %v663 = vld [vmem:[#allocation7 + $0xd4] sm:$0xf]
        %v664 = vld [vmem:[#allocation7 + $0xd8] sm:$0xf]
        %v665 = vld [vmem:[#allocation7 + $0xdc] sm:$0xf]
        %v666 = vld [vmem:[#allocation7 + $0xe0] sm:$0xf]
        %v667 = vld [vmem:[#allocation7 + $0xe4] sm:$0xf]
        %v668 = vld [vmem:[#allocation7 + $0xe8] sm:$0xf]
        %v669 = vld [vmem:[#allocation7 + $0xec] sm:$0xf]
        %v670 = vld [vmem:[#allocation7 + $0xf0] sm:$0xf]
        %v671 = vld [vmem:[#allocation7 + $0xf4] sm:$0xf]
        %v672 = vld [vmem:[#allocation7 + $0xf8] sm:$0xf]
        %v673 = vld [vmem:[#allocation7 + $0xfc] sm:$0xf]
        %v706 = vunpack.c.l.b16 %v642
        %v707 = vunpack.c.l.b16 %v643
        %v708 = vunpack.c.l.b16 %v644
        %v709 = vunpack.c.l.b16 %v645
        %v710 = vunpack.c.l.b16 %v646
        %v711 = vunpack.c.l.b16 %v647
        %v712 = vunpack.c.l.b16 %v648
        %v713 = vunpack.c.l.b16 %v649
        %v714 = vunpack.c.l.b16 %v650
        %v715 = vunpack.c.l.b16 %v651
        %v716 = vunpack.c.l.b16 %v652
        %v717 = vunpack.c.l.b16 %v653
        %v718 = vunpack.c.l.b16 %v654
        %v719 = vunpack.c.l.b16 %v655
        %v720 = vunpack.c.l.b16 %v656
        %v721 = vunpack.c.l.b16 %v657
        %v722 = vunpack.c.l.b16 %v658
        %v723 = vunpack.c.l.b16 %v659
        %v724 = vunpack.c.l.b16 %v660
        %v725 = vunpack.c.l.b16 %v661
        %v726 = vunpack.c.l.b16 %v662
        %v727 = vunpack.c.l.b16 %v663
        %v728 = vunpack.c.l.b16 %v664
        %v729 = vunpack.c.l.b16 %v665
        %v730 = vunpack.c.l.b16 %v666
        %v731 = vunpack.c.l.b16 %v667
        %v732 = vunpack.c.l.b16 %v668
        %v733 = vunpack.c.l.b16 %v669
        %v734 = vunpack.c.l.b16 %v670
        %v735 = vunpack.c.l.b16 %v671
        %v736 = vunpack.c.l.b16 %v672
        %v737 = vunpack.c.l.b16 %v673
        %v738 = vpack.c.b16 %v707, %v706
        %v739 = vpack.c.b16 %v709, %v708
        %v740 = vpack.c.b16 %v711, %v710
        %v741 = vpack.c.b16 %v713, %v712
        %v742 = vpack.c.b16 %v715, %v714
        %v743 = vpack.c.b16 %v717, %v716
        %v744 = vpack.c.b16 %v719, %v718
        %v745 = vpack.c.b16 %v721, %v720
        %v746 = vpack.c.b16 %v723, %v722
        %v747 = vpack.c.b16 %v725, %v724
        %v748 = vpack.c.b16 %v727, %v726
        %v749 = vpack.c.b16 %v729, %v728
        %v750 = vpack.c.b16 %v731, %v730
        %v751 = vpack.c.b16 %v733, %v732
        %v752 = vpack.c.b16 %v735, %v734
        %v753 = vpack.c.b16 %v737, %v736
        %770 = vmatprep.subr.bf16.mxu0 0
        %771 = vmatpush1.bf16.msra.mxu0 %v738
        %772 = vmatprep.subr.bf16.mxu0 0
        %773 = vmatpush1.bf16.msra.mxu0 %v739
        %774 = vmatprep.subr.bf16.mxu0 0
        %775 = vmatpush1.bf16.msra.mxu0 %v740
        %776 = vmatprep.subr.bf16.mxu0 0
        %777 = vmatpush1.bf16.msra.mxu0 %v741
        %778 = vmatprep.subr.bf16.mxu0 0
        %779 = vmatpush1.bf16.msra.mxu0 %v742
        %780 = vmatprep.subr.bf16.mxu0 0
        %781 = vmatpush1.bf16.msra.mxu0 %v743
        %782 = vmatprep.subr.bf16.mxu0 0
        %783 = vmatpush1.bf16.msra.mxu0 %v744
        %784 = vmatprep.subr.bf16.mxu0 0
        %785 = vmatpush1.bf16.msra.mxu0 %v745
        %786 = vmatprep.subr.bf16.mxu0 0
        %787 = vmatpush1.bf16.msra.mxu0 %v746
        %788 = vmatprep.subr.bf16.mxu0 0
        %789 = vmatpush1.bf16.msra.mxu0 %v747
        %790 = vmatprep.subr.bf16.mxu0 0
        %791 = vmatpush1.bf16.msra.mxu0 %v748
        %792 = vmatprep.subr.bf16.mxu0 0
        %793 = vmatpush1.bf16.msra.mxu0 %v749
        %794 = vmatprep.subr.bf16.mxu0 0
        %795 = vmatpush1.bf16.msra.mxu0 %v750
        %796 = vmatprep.subr.bf16.mxu0 0
        %797 = vmatpush1.bf16.msra.mxu0 %v751
        %798 = vmatprep.subr.bf16.mxu0 0
        %799 = vmatpush1.bf16.msra.mxu0 %v752
        %800 = vmatprep.subr.bf16.mxu0 0
        %801 = vmatpush1.bf16.msra.mxu0 %v753
        %802 = vmatprep.mubr.bf16.mxu0 %v641
        %803 = vmatmul.mubr.bf16.gmra.mrb[0].mxu0 %v640
        %v804 = vpop.f32.mrb[0].mxu0
        %v805 = vadd.f32 0.0, %v804
        %v806 = vpop.f32.mrb[0].mxu0
        %v807 = vpop.f32.mrb[0].mxu0
        %v808 = vpop.f32.mrb[0].mxu0
        %809 = vdwg.mxu0
        %v842 = vunpack.c.l.b16 %v441
        %v843 = vunpack.c.l.b16 %v442
        %v844 = vunpack.c.l.b16 %v443
        %v845 = vunpack.c.l.b16 %v444
        %v846 = vunpack.c.l.b16 %v445
        %v847 = vunpack.c.l.b16 %v446
        %v848 = vunpack.c.l.b16 %v447
        %v849 = vunpack.c.l.b16 %v448
        %v850 = vunpack.c.l.b16 %v449
        %v851 = vunpack.c.l.b16 %v450
        %v852 = vunpack.c.l.b16 %v451
        %v853 = vunpack.c.l.b16 %v452
        %v854 = vunpack.c.l.b16 %v453
        %v855 = vunpack.c.l.b16 %v454
        %v856 = vunpack.c.l.b16 %v455
        %v857 = vunpack.c.l.b16 %v456
        %v858 = vunpack.c.l.b16 %v457
        %v859 = vunpack.c.l.b16 %v458
        %v860 = vunpack.c.l.b16 %v459
        %v861 = vunpack.c.l.b16 %v460
        %v862 = vunpack.c.l.b16 %v461
        %v863 = vunpack.c.l.b16 %v462
        %v864 = vunpack.c.l.b16 %v463
        %v865 = vunpack.c.l.b16 %v464
        %v866 = vunpack.c.l.b16 %v465
        %v867 = vunpack.c.l.b16 %v466
        %v868 = vunpack.c.l.b16 %v467
        %v869 = vunpack.c.l.b16 %v468
        %v870 = vunpack.c.l.b16 %v469
        %v871 = vunpack.c.l.b16 %v470
        %v872 = vunpack.c.l.b16 %v471
        %v873 = vunpack.c.l.b16 %v472
        %v874 = vpack.c.b16 %v843, %v842
        %v875 = vpack.c.b16 %v845, %v844
        %v876 = vpack.c.b16 %v847, %v846
        %v877 = vpack.c.b16 %v849, %v848
        %v878 = vpack.c.b16 %v851, %v850
        %v879 = vpack.c.b16 %v853, %v852
        %v880 = vpack.c.b16 %v855, %v854
        %v881 = vpack.c.b16 %v857, %v856
        %v882 = vpack.c.b16 %v859, %v858
        %v883 = vpack.c.b16 %v861, %v860
        %v884 = vpack.c.b16 %v863, %v862
        %v885 = vpack.c.b16 %v865, %v864
        %v886 = vpack.c.b16 %v867, %v866
        %v887 = vpack.c.b16 %v869, %v868
        %v888 = vpack.c.b16 %v871, %v870
        %v889 = vpack.c.b16 %v873, %v872
        %906 = vmatprep.subr.bf16.mxu0 0
        %907 = vmatpush1.bf16.msra.mxu0 %v874
        %908 = vmatprep.subr.bf16.mxu0 0
        %909 = vmatpush1.bf16.msra.mxu0 %v875
        %910 = vmatprep.subr.bf16.mxu0 0
        %911 = vmatpush1.bf16.msra.mxu0 %v876
        %912 = vmatprep.subr.bf16.mxu0 0
        %913 = vmatpush1.bf16.msra.mxu0 %v877
        %914 = vmatprep.subr.bf16.mxu0 0
        %915 = vmatpush1.bf16.msra.mxu0 %v878
        %916 = vmatprep.subr.bf16.mxu0 0
        %917 = vmatpush1.bf16.msra.mxu0 %v879
        %918 = vmatprep.subr.bf16.mxu0 0
        %919 = vmatpush1.bf16.msra.mxu0 %v880
        %920 = vmatprep.subr.bf16.mxu0 0
        %921 = vmatpush1.bf16.msra.mxu0 %v881
        %922 = vmatprep.subr.bf16.mxu0 0
        %923 = vmatpush1.bf16.msra.mxu0 %v882
        %924 = vmatprep.subr.bf16.mxu0 0
        %925 = vmatpush1.bf16.msra.mxu0 %v883
        %926 = vmatprep.subr.bf16.mxu0 0
        %927 = vmatpush1.bf16.msra.mxu0 %v884
        %928 = vmatprep.subr.bf16.mxu0 0
        %929 = vmatpush1.bf16.msra.mxu0 %v885
        %930 = vmatprep.subr.bf16.mxu0 0
        %931 = vmatpush1.bf16.msra.mxu0 %v886
        %932 = vmatprep.subr.bf16.mxu0 0
        %933 = vmatpush1.bf16.msra.mxu0 %v887
        %934 = vmatprep.subr.bf16.mxu0 0
        %935 = vmatpush1.bf16.msra.mxu0 %v888
        %936 = vmatprep.subr.bf16.mxu0 0
        %937 = vmatpush1.bf16.msra.mxu0 %v889
        %938 = vmatprep.mubr.bf16.mxu0 %v440
        %939 = vmatmul.mubr.bf16.gmra.mrb[0].mxu0 %v439
        %v940 = vpop.f32.mrb[0].mxu0
        %v941 = vadd.f32 %v805, %v940
        %v942 = vpop.f32.mrb[0].mxu0
        %v943 = vpop.f32.mrb[0].mxu0
        %v944 = vpop.f32.mrb[0].mxu0
        %945 = vdwg.mxu0
        %v946 = vld [vmem:[%s4] sm:$0x1]
        %v948 = vlaneseq
        %v949 = vshrl.u32 %v948, 7
        %v950 = vsub.s32 0, %v949
        %v951 = vrot.slane %v946, %v950
        %v953 = vadd.f32 %v941, %v951
        %v954 = vadd.f32 %v953, %v270
        %955 = vst [vmem:[%s268] sm:$0xff] %v954
        %s956 = sand.u32 %s141, 1
        %s957 = scalar_lea.sflag [#allocation4], %s956
        %s958 = sand.u32 %s141, 1
        %s959 = smul.addr %s958, 8
        %s960 = scalar_lea.vmem [#allocation8], %s959
        // Predicated region
        $region53: #{tpu_custom_call.1} parent=39 // pred_check
          %p961 = pneg %p151
        $region54: #{tpu_custom_call.1} parent=39 // pred_check_branch
          %963 = sbr.rel (%p961) target = $region56
        $region55: #{tpu_custom_call.1} parent=39 // pred_region
          %s965 = ssub.s32 128, 128
          %966 = vsyncadd %s957, %s965
          %s967 = smul.addr %s23, 128
          %s968 = scalar_lea.hbm %s5, %s967
          %s970 = sshll.u32 %s960, 4
          %s971 = int_to_ptr.vmem [resolvable:$true] %s970
          %973 = dma.vmem_to_hbm [thread:$0]  %s971, 128, %s968, %s957
        $region56: #{tpu_custom_call.1} parent=39 // pred_fallthru
          _
      $region40: #{tpu_custom_call.1} parent=5 // pred_fallthru
        _
      %p974 = scmp.le.s32.totalorder 2, %s18
      // Predicated region
      $region57: #{tpu_custom_call.1} parent=5 // pred_check
        %p975 = pneg %p974
      $region58: #{tpu_custom_call.1} parent=5 // pred_check_branch
        %977 = sbr.rel (%p975) target = $region60
      $region59: #{tpu_custom_call.1} parent=5 // pred_region
        %s978 = ssub.s32 %s18, 2
        // Predicated region
        $region61: #{tpu_custom_call.1} parent=59 // pred_check
          %p979 = pneg %p157
        $region62: #{tpu_custom_call.1} parent=59 // pred_check_branch
          %981 = sbr.rel (%p979) target = $region64
        $region63: #{tpu_custom_call.1} parent=59 // pred_region
          %s982 = sand.u32 %s142, 1
          %s983 = scalar_lea.sflag [#allocation4], %s982
          %s984 = sand.u32 %s142, 1
          %s985 = smul.addr %s984, 8
          %s986 = scalar_lea.vmem [#allocation8], %s985
          %987 = dma.done %s983, 128
        $region64: #{tpu_custom_call.1} parent=59 // pred_fallthru
          _
      $region60: #{tpu_custom_call.1} parent=5 // pred_fallthru
        _
    $region6: #{tpu_custom_call.1} parent=1 // loop_footer
      %s22 = sadd.s32 1, %s18
    $region7: #{tpu_custom_call.1} parent=1 // loop_footer_branch
      %17 = sbr.rel target = $region3
    $region8: #{tpu_custom_call.1} parent=1 // loop_exit
      _
    %988 = vsyncpa [#allocation3], 1
    %s989 = scalar_lea.sflag [#allocation3], 1
    %990 = vsyncpa %s989, 1
    %991 = vsyncpa [#allocation6], 1
    %992 = vsyncpa [#allocation4], 1
    %s993 = scalar_lea.sflag [#allocation4], 1
    %994 = vsyncpa %s993, 1

</llo_original>
